<compile_context>
chip_gen: v7x
topology: tpu7x:2x2x1
jax: 0.10.0
libtpu: 0.0.40
codegen_flags: <defaults>
</compile_context>

<pallas_src>
import functools
import math

import jax
import jax.numpy as jnp
from jax.experimental import pallas as pl
from jax.experimental.pallas import tpu as pltpu


_DIRECT_LOUT_MIN = 256                   # per-sample output already lane-dense
_VMEM_LIMIT_BYTES = 32 * 1024 * 1024     # safe on v5e/v6e (128 MiB) and v7x (64 MiB)
_VMEM_DATA_BUDGET = 24 * 1024 * 1024     # per-step blocks + live f32 values


def _epilogue(acc, bias, negative_slope, saturation, out_dtype):
    """f32 bias add + LeakyReLU + clamp(max=saturation), then cast."""
    acc = acc + bias                                   # (C_out, 1) f32 broadcast
    if 0.0 <= negative_slope <= 1.0:                   # LeakyReLU == max(x, a*x)
        act = jnp.maximum(acc, negative_slope * acc)
    else:                                              # general fallback
        act = jnp.where(acc >= 0.0, acc, negative_slope * acc)
    return jnp.minimum(act, saturation).astype(out_dtype)


def _conv1d_act_direct_kernel(x_ref, w_ref, b_ref, o_ref, *, kernel_size, l_out,
                              negative_slope, saturation):
    """Per-sample layout.

    x_ref : (C_in, W)        one zero-padded sample (W = L + 2*padding)
    w_ref : (K, C_out, C_in) k-major stacked weight
    b_ref : (C_out, 1)       float32 bias
    o_ref : (C_out, L_out)   L_out = W - K + 1
    """
    x = x_ref[...]
    acc = jnp.dot(w_ref[0], x[:, 0:l_out], preferred_element_type=jnp.float32)
    for k in range(1, kernel_size):                    # static, small K -> unrolled
        acc = acc + jnp.dot(w_ref[k], x[:, k:k + l_out],
                            preferred_element_type=jnp.float32)
    o_ref[...] = _epilogue(acc, b_ref[...], negative_slope, saturation, o_ref.dtype)


def _conv1d_act_folded_kernel(x_ref, w_ref, b_ref, o_ref, *, kernel_size,
                              negative_slope, saturation):
    """Batch-folded lane-dense layout.

    x_ref / o_ref : (C, T) with T = B_TILE * W lanes.
    Shifted operands wrap around within the tile; the wrapped values only land
    in the K-1 per-sample garbage columns that the wrapper slices away, so no
    zero fill (and no scratch) is needed.
    """
    x = x_ref[...]
    acc = jnp.dot(w_ref[0], x, preferred_element_type=jnp.float32)
    for k in range(1, kernel_size):
        # jnp.roll(x, -k) == concat([x[:, k:], x[:, :k]]): shift left by k lanes.
        # (pltpu.roll(x, shift=T - k, axis=1) is the XLU-slot equivalent.)
        acc = acc + jnp.dot(w_ref[k], jnp.roll(x, -k, axis=1),
                            preferred_element_type=jnp.float32)
    o_ref[...] = _epilogue(acc, b_ref[...], negative_slope, saturation, o_ref.dtype)


def _folded_footprint(b, w, c_in, c_out, bytes_in, bytes_out):
    t = b * w
    # double-buffered input + output blocks, plus the live f32 accumulator and
    # one shifted operand the compiler keeps around.
    return t * (2 * c_in * bytes_in + 2 * c_out * bytes_out + (c_in + c_out) * 4)


def _plan_folded(n, w, c_in, c_out, bytes_in, bytes_out):
    """Pick (n_pad, b_tile) for the batch-folded layout.

    Prefers the LARGEST batch tile whose lane width (b*w) is a multiple of 128
    and whose VMEM footprint fits the budget, with >= 2 grid steps (pipelining,
    v7x dual-TC).  Tiny problems run as one full-array block (no per-step
    overhead); otherwise the batch is zero-padded so an aligned tiling exists.
    """
    def fits(b):
        return _folded_footprint(b, w, c_in, c_out, bytes_in, bytes_out) <= _VMEM_DATA_BUDGET

    aligned = [b for b in range(1, n + 1)
               if n % b == 0 and (b * w) % 128 == 0 and fits(b)]
    multi = [b for b in aligned if n // b >= 2]
    if multi:                         # >= 2 lane-dense steps, largest fitting tile
        return n, max(multi)
    if fits(n):                       # tiny problem: one full-array block
        return n, n
    # Whole batch does not fit and no divisor is 128-lane aligned: pad the batch
    # so b0-sample tiles give 128-lane-aligned blocks.
    b0 = 128 // math.gcd(w, 128)
    if not fits(b0):
        raise ValueError("conv1d_activation: a single 128-lane-aligned batch tile "
                         "exceeds the VMEM budget for this shape.")
    b = b0
    while fits(2 * b):
        b *= 2
    n_pad = max(-(-n // b) * b, 2 * b)   # guarantee >= 2 grid steps
    return n_pad, b


def _compiler_params(need_bytes):
    kwargs = dict(dimension_semantics=("parallel",))
    if need_bytes > 12 * 1024 * 1024:    # raise v5e's 16 MiB default scoped VMEM
        kwargs["vmem_limit_bytes"] = _VMEM_LIMIT_BYTES
    return pltpu.CompilerParams(**kwargs)


def conv1d_activation(x, weight, bias, *, padding, negative_slope, saturation,
                      compute_dtype=None):
    """Conv1d(padding=padding, stride=1) + LeakyReLU(negative_slope) + clamp(max=saturation).

    x: (N, C_in, L); weight: (C_out, C_in, K); bias: (C_out,).
    Returns (N, C_out, L_out) with L_out = L + 2*padding - K + 1 (PyTorch semantics).

    compute_dtype: optionally jnp.bfloat16 (recommended on v6e/v7x) to halve HBM
    traffic for x / weight; bias, accumulation and activation stay float32.
    """
    n, c_in, l = x.shape
    c_out, c_in_w, k = weight.shape
    assert c_in_w == c_in, "weight / input channel mismatch"
    w_cols = l + 2 * padding
    l_out = w_cols - k + 1
    assert l_out >= 1, "kernel larger than padded input"

    out_dtype = x.dtype
    if compute_dtype is None:
        compute_dtype = x.dtype
    bytes_in = jnp.dtype(compute_dtype).itemsize
    bytes_out = jnp.dtype(out_dtype).itemsize

    # k-major stacked weight (K, C_out, C_in) and f32 bias column.
    w_stack = jnp.transpose(weight, (2, 0, 1)).astype(compute_dtype)
    bias2d = bias.reshape(c_out, 1).astype(jnp.float32)

    if l_out >= _DIRECT_LOUT_MIN:
        # ---- direct per-sample layout: no wrapper transposes, no garbage cols ----
        x_pad = jnp.pad(x, ((0, 0), (0, 0), (padding, padding))).astype(compute_dtype)
        need = (2 * c_in * w_cols * bytes_in + 2 * c_out * l_out * bytes_out
                + (c_in + c_out) * w_cols * 4)
        kernel = functools.partial(
            _conv1d_act_direct_kernel, kernel_size=k, l_out=l_out,
            negative_slope=negative_slope, saturation=saturation)
        return pl.pallas_call(
            kernel,
            out_shape=jax.ShapeDtypeStruct((n, c_out, l_out), out_dtype),
            grid_spec=pltpu.PrefetchScalarGridSpec(
                num_scalar_prefetch=0,
                grid=(n,),
                in_specs=[
                    pl.BlockSpec((None, c_in, w_cols), lambda i: (i, 0, 0)),
                    pl.BlockSpec((k, c_out, c_in), lambda i: (0, 0, 0)),
                    pl.BlockSpec((c_out, 1), lambda i: (0, 0)),
                ],
                out_specs=pl.BlockSpec((None, c_out, l_out), lambda i: (i, 0, 0)),
            ),
            compiler_params=_compiler_params(need),
        )(x_pad, w_stack, bias2d)

    # ---- batch-folded lane-dense layout (small L) ----
    n_pad, b_tile = _plan_folded(n, w_cols, c_in, c_out, bytes_in, bytes_out)
    t_cols = b_tile * w_cols
    need = _folded_footprint(b_tile, w_cols, c_in, c_out, bytes_in, bytes_out)

    # (N, C_in, L) -> zero-pad batch & length -> (C_in, N_pad*W) lane-dense slab
    # (single fused relayout pass under jit).
    x_flat = (jnp.pad(x, ((0, n_pad - n), (0, 0), (padding, padding)))
              .transpose(1, 0, 2)
              .reshape(c_in, n_pad * w_cols)
              .astype(compute_dtype))

    kernel = functools.partial(
        _conv1d_act_folded_kernel, kernel_size=k,
        negative_slope=negative_slope, saturation=saturation)
    out2d = pl.pallas_call(
        kernel,
        out_shape=jax.ShapeDtypeStruct((c_out, n_pad * w_cols), out_dtype),
        grid_spec=pltpu.PrefetchScalarGridSpec(
            num_scalar_prefetch=0,
            grid=(n_pad // b_tile,),
            in_specs=[
                pl.BlockSpec((c_in, t_cols), lambda i: (0, i)),
                pl.BlockSpec((k, c_out, c_in), lambda i: (0, 0, 0)),
                pl.BlockSpec((c_out, 1), lambda i: (0, 0)),
            ],
            out_specs=pl.BlockSpec((c_out, t_cols), lambda i: (0, i)),
        ),
        compiler_params=_compiler_params(need),
    )(x_flat, w_stack, bias2d)

    # (C_out, N_pad*W) -> (N, C_out, L_out): drop padded samples + garbage columns.
    return out2d.reshape(c_out, n_pad, w_cols)[:, :n, :l_out].transpose(1, 0, 2)


def _reference(x, weight, bias, *, padding, negative_slope, saturation):
    # Pure-JAX reference for Conv1d + LeakyReLU + clamp (PyTorch semantics).
    out = jax.lax.conv_general_dilated(
        x, weight,
        window_strides=(1,),
        padding=[(padding, padding)],
        dimension_numbers=("NCH", "OIH", "NCH"),
        precision=jax.lax.Precision.HIGHEST,
    ) + bias.reshape(1, -1, 1)
    act = jnp.where(out >= 0, out, negative_slope * out)
    return jnp.minimum(act, saturation)


if __name__ == "__main__":
    # Module hyper-params (consistent with Conv1dActivation.__init__)
    in_channels, out_channels = 4, 8
    kernel_size, padding = 3, 1
    negative_slope, saturation = 0.1, 20.0

    key = jax.random.PRNGKey(0)
    kx, kw, kb, kx2 = jax.random.split(key, 4)

    # initializer(self.conv.weight, 0.0, 0.05) -> normal(mean=0, std=0.05)
    weight = 0.05 * jax.random.normal(
        kw, (out_channels, in_channels, kernel_size), dtype=jnp.float32)
    # PyTorch Conv1d default bias init: U(-1/sqrt(fan_in), 1/sqrt(fan_in))
    fan_in = in_channels * kernel_size
    bound = 1.0 / (fan_in ** 0.5)
    bias = jax.random.uniform(
        kb, (out_channels,), minval=-bound, maxval=bound, dtype=jnp.float32)

    fn = jax.jit(functools.partial(
        conv1d_activation, padding=padding,
        negative_slope=negative_slope, saturation=saturation))

    # 1) Small sequence -> batch-folded lane-dense path.
    batch, length = 2, 16
    x_small = jax.random.normal(kx, (batch, in_channels, length), dtype=jnp.float32)
    out_small = jax.block_until_ready(fn(x_small, weight, bias))
    ref_small = _reference(x_small, weight, bias, padding=padding,
                           negative_slope=negative_slope, saturation=saturation)
    assert out_small.shape == ref_small.shape == (batch, out_channels, length)
    assert jnp.allclose(out_small, ref_small, atol=1e-4, rtol=1e-4)

    # 2) Lane-dense sequence -> direct per-sample path (no wrapper relayouts).
    batch2, length2 = 4, 512
    x_big = jax.random.normal(kx2, (batch2, in_channels, length2), dtype=jnp.float32)
    out_big = jax.block_until_ready(fn(x_big, weight, bias))
    ref_big = _reference(x_big, weight, bias, padding=padding,
                         negative_slope=negative_slope, saturation=saturation)
    assert out_big.shape == ref_big.shape == (batch2, out_channels, length2)
    assert jnp.allclose(out_big, ref_big, atol=1e-4, rtol=1e-4)

    print("KERNEL_OK")
</pallas_src>

<mosaic_0001>
module attributes {stable_mosaic.version = 11 : i64} {
  func.func @_conv1d_act_folded_kernel(%arg0: i32, %arg1: memref<4x36xf32, #tpu.memory_space<vmem>>, %arg2: memref<3x8x4xf32, #tpu.memory_space<vmem>>, %arg3: memref<8x1xf32, #tpu.memory_space<vmem>>, %arg4: memref<8x36xf32, #tpu.memory_space<vmem>>) attributes {dimension_semantics = [#tpu.dimension_semantics<parallel>], iteration_bounds = array<i64: 1>, scalar_prefetch = 0 : i64, scratch_operands = 0 : i64, tpu.core_type = #tpu.core_type<tc>, window_params = [{transform_indices = @transform_0, window_bounds = array<i64: 4, 36>}, {pipeline_mode = #tpu.pipeline_mode<synchronous>, transform_indices = @transform_1, window_bounds = array<i64: 3, 8, 4>}, {pipeline_mode = #tpu.pipeline_mode<synchronous>, transform_indices = @transform_2, window_bounds = array<i64: 8, 1>}, {transform_indices = @transform_3, window_bounds = array<i64: 8, 36>}]} {
    %c0 = arith.constant 0 : index
    %c0_0 = arith.constant 0 : index
    %0 = vector.load %arg1[%c0, %c0_0] : memref<4x36xf32, #tpu.memory_space<vmem>>, vector<4x36xf32>
    %c0_1 = arith.constant 0 : index
    %c0_2 = arith.constant 0 : index
    %c0_3 = arith.constant 0 : index
    %1 = vector.load %arg2[%c0_1, %c0_2, %c0_3] : memref<3x8x4xf32, #tpu.memory_space<vmem>>, vector<1x8x4xf32>
    %2 = vector.shape_cast %1 : vector<1x8x4xf32> to vector<8x4xf32>
    %cst = arith.constant dense<0.000000e+00> : vector<8x36xf32>
    %3 = tpu.matmul %2, %0, %cst {dimension_numbers = #tpu.dot_dimension_numbers<[1], [0], [0], [1], [0, 0, 1, 1], [], []>} : vector<8x4xf32>, vector<4x36xf32>, vector<8x36xf32> -> vector<8x36xf32>
    %c1 = arith.constant 1 : index
    %c0_4 = arith.constant 0 : index
    %c0_5 = arith.constant 0 : index
    %4 = vector.load %arg2[%c1, %c0_4, %c0_5] : memref<3x8x4xf32, #tpu.memory_space<vmem>>, vector<1x8x4xf32>
    %5 = vector.shape_cast %4 : vector<1x8x4xf32> to vector<8x4xf32>
    %6 = vector.extract_strided_slice %0 {offsets = [0, 1], sizes = [4, 35], strides = [1, 1]} : vector<4x36xf32> to vector<4x35xf32>
    %7 = vector.extract_strided_slice %0 {offsets = [0, 0], sizes = [4, 1], strides = [1, 1]} : vector<4x36xf32> to vector<4x1xf32>
    %8 = tpu.concatenate %6, %7 in 1 : vector<4x35xf32>, vector<4x1xf32> -> vector<4x36xf32>
    %cst_6 = arith.constant dense<0.000000e+00> : vector<8x36xf32>
    %9 = tpu.matmul %5, %8, %cst_6 {dimension_numbers = #tpu.dot_dimension_numbers<[1], [0], [0], [1], [0, 0, 1, 1], [], []>} : vector<8x4xf32>, vector<4x36xf32>, vector<8x36xf32> -> vector<8x36xf32>
    %10 = arith.addf %3, %9 : vector<8x36xf32>
    %c2 = arith.constant 2 : index
    %c0_7 = arith.constant 0 : index
    %c0_8 = arith.constant 0 : index
    %11 = vector.load %arg2[%c2, %c0_7, %c0_8] : memref<3x8x4xf32, #tpu.memory_space<vmem>>, vector<1x8x4xf32>
    %12 = vector.shape_cast %11 : vector<1x8x4xf32> to vector<8x4xf32>
    %13 = vector.extract_strided_slice %0 {offsets = [0, 2], sizes = [4, 34], strides = [1, 1]} : vector<4x36xf32> to vector<4x34xf32>
    %14 = vector.extract_strided_slice %0 {offsets = [0, 0], sizes = [4, 2], strides = [1, 1]} : vector<4x36xf32> to vector<4x2xf32>
    %15 = tpu.concatenate %13, %14 in 1 : vector<4x34xf32>, vector<4x2xf32> -> vector<4x36xf32>
    %cst_9 = arith.constant dense<0.000000e+00> : vector<8x36xf32>
    %16 = tpu.matmul %12, %15, %cst_9 {dimension_numbers = #tpu.dot_dimension_numbers<[1], [0], [0], [1], [0, 0, 1, 1], [], []>} : vector<8x4xf32>, vector<4x36xf32>, vector<8x36xf32> -> vector<8x36xf32>
    %17 = arith.addf %10, %16 : vector<8x36xf32>
    %c0_10 = arith.constant 0 : index
    %c0_11 = arith.constant 0 : index
    %18 = vector.load %arg3[%c0_10, %c0_11] : memref<8x1xf32, #tpu.memory_space<vmem>>, vector<8x1xf32>
    %19 = vector.broadcast %18 : vector<8x1xf32> to vector<8x36xf32>
    %20 = arith.addf %17, %19 : vector<8x36xf32>
    %cst_12 = arith.constant 1.000000e-01 : f32
    %21 = vector.broadcast %cst_12 : f32 to vector<8x36xf32>
    %22 = arith.mulf %21, %20 : vector<8x36xf32>
    %23 = arith.maximumf %20, %22 : vector<8x36xf32>
    %cst_13 = arith.constant 2.000000e+01 : f32
    %24 = vector.broadcast %cst_13 : f32 to vector<8x36xf32>
    %25 = arith.minimumf %23, %24 : vector<8x36xf32>
    %c0_14 = arith.constant 0 : index
    %c0_15 = arith.constant 0 : index
    %26 = vector.load %arg4[%c0_14, %c0_15] : memref<8x36xf32, #tpu.memory_space<vmem>>, vector<8x36xf32>
    tpu.vector_store %arg4[%c0_14, %c0_15], %25 {strides = array<i32>} : memref<8x36xf32, #tpu.memory_space<vmem>>, vector<8x36xf32>,
    return
  }
  func.func @transform_0(%arg0: i32) -> (i32, i32) {
    %c0_i32 = arith.constant 0 : i32
    %c0_i32_0 = arith.constant 0 : i32
    return %c0_i32, %arg0 : i32, i32
  }
  func.func @transform_1(%arg0: i32) -> (i32, i32, i32) {
    %c0_i32 = arith.constant 0 : i32
    %c0_i32_0 = arith.constant 0 : i32
    %c0_i32_1 = arith.constant 0 : i32
    %c0_i32_2 = arith.constant 0 : i32
    return %c0_i32, %c0_i32_0, %c0_i32_1 : i32, i32, i32
  }
  func.func @transform_2(%arg0: i32) -> (i32, i32) {
    %c0_i32 = arith.constant 0 : i32
    %c0_i32_0 = arith.constant 0 : i32
    %c0_i32_1 = arith.constant 0 : i32
    return %c0_i32, %c0_i32_0 : i32, i32
  }
  func.func @transform_3(%arg0: i32) -> (i32, i32) {
    %c0_i32 = arith.constant 0 : i32
    %c0_i32_0 = arith.constant 0 : i32
    return %c0_i32, %arg0 : i32, i32
  }
}

</mosaic_0001>

<llo_original>
// kernel: conv1d_activation.1
$region0: #{conv1d_activation.1}
  #allocation0 [shape = 'u32[]', space=smem, size = 0x4, offset = 0x4, fixed_abs, tag = 'smem constant byte address 0x4 - core index']
  #allocation1 [shape = 'u32[144,128]{1,0:T(1,128)}', space=vmem, size = 0x12000, scoped, tag = 'internal scratch']
  %s0 = inlined_call_operand.vmem [shape: f32[4,36], index: 0, kind: input, shape index: {}]
  %s1 = inlined_call_operand.vmem [shape: f32[3,8,4], index: 1, kind: input, shape index: {}]
  %s2 = inlined_call_operand.vmem [shape: f32[8,1], index: 2, kind: input, shape index: {}]
  %s3 = inlined_call_operand.vmem [shape: f32[8,36], index: 3, kind: output, shape index: {}]
  %s4 = sld [smem:[#allocation0]]
  $region22: #{conv1d_activation.1} parent=0
    _
  %s6 = ssub.s32 1, %s4
  %s7 = scalar_select 0, %s6, %s4
  // Predicated region
  $region2: #{conv1d_activation.1} parent=0 // pred_check
    _
  $region3: #{conv1d_activation.1} parent=0 // pred_check_branch
    %9 = sbr.rel (0) target = $region5
  $region4: #{conv1d_activation.1} parent=0 // pred_region
    _
  $region5: #{conv1d_activation.1} parent=0 // pred_fallthru
    _
  // Predicated region
  $region6: #{conv1d_activation.1} parent=0 // pred_check
    _
  $region7: #{conv1d_activation.1} parent=0 // pred_check_branch
    %11 = sbr.rel (0) target = $region9
  $region8: #{conv1d_activation.1} parent=0 // pred_region
    _
  $region9: #{conv1d_activation.1} parent=0 // pred_fallthru
    _
  // Predicated region
  $region10: #{conv1d_activation.1} parent=0 // pred_check
    _
  $region11: #{conv1d_activation.1} parent=0 // pred_check_branch
    %13 = sbr.rel (0) target = $region13
  $region12: #{conv1d_activation.1} parent=0 // pred_region
    _
  $region13: #{conv1d_activation.1} parent=0 // pred_fallthru
    _
  %v14 = vld [vmem:[%s0] sm:$0xf]
  %v15 = vld [vmem:[%s1] sm:$0xff]
  %s16 = scalar_lea.vmem %s1, 8
  %v17 = vld [vmem:[%s16] sm:$0xff]
  %19 = vrot.lane.b32.xlu0 %v14, 127
  %v20 = vpop.permute.xlu0 %19
  %22 = vrot.lane.b32.xlu0 %v14, 35
  %v23 = vpop.permute.xlu0 %22
  %vm25 = vcmask 285696
  %v26 = vsel %vm25, %v20, %v23
  %vm27 = vcmask 31744
  %v29 = vsel %vm27, %v17, 0
  %vm31 = vcmask 1043456
  %v33 = vsel %vm31, %v26, 0
  %35 = vmatprep.subr.mxu0 0.0
  %36 = vmatpush1.msra.mxu0 %v33
  %37 = vmatprep.subr.mxu0 0.0
  %38 = vmatpush1.msra.mxu0 0.0
  %39 = vmatprep.subr.mxu0 0.0
  %40 = vmatpush1.msra.mxu0 0.0
  %41 = vmatprep.subr.mxu0 0.0
  %42 = vmatpush1.msra.mxu0 0.0
  %43 = vmatprep.subr.mxu0 0.0
  %44 = vmatpush1.msra.mxu0 0.0
  %45 = vmatprep.subr.mxu0 0.0
  %46 = vmatpush1.msra.mxu0 0.0
  %47 = vmatprep.subr.mxu0 0.0
  %48 = vmatpush1.msra.mxu0 0.0
  %49 = vmatprep.subr.mxu0 0.0
  %50 = vmatpush1.msra.mxu0 0.0
  %51 = vmatprep.subr.mxu0 0.0
  %52 = vmatpush1.msra.mxu0 0.0
  %53 = vmatprep.subr.mxu0 0.0
  %54 = vmatpush1.msra.mxu0 0.0
  %55 = vmatprep.subr.mxu0 0.0
  %56 = vmatpush1.msra.mxu0 0.0
  %57 = vmatprep.subr.mxu0 0.0
  %58 = vmatpush1.msra.mxu0 0.0
  %59 = vmatprep.subr.mxu0 0.0
  %60 = vmatpush1.msra.mxu0 0.0
  %61 = vmatprep.subr.mxu0 0.0
  %62 = vmatpush1.msra.mxu0 0.0
  %63 = vmatprep.subr.mxu0 0.0
  %64 = vmatpush1.msra.mxu0 0.0
  %65 = vmatprep.subr.mxu0 0.0
  %66 = vmatpush1.msra.mxu0 0.0
  %67 = vmatprep.subr.mxu0 0.0
  %68 = vmatpush1.msra.mxu0 0.0
  %69 = vmatprep.subr.mxu0 0.0
  %70 = vmatpush1.msra.mxu0 0.0
  %71 = vmatprep.subr.mxu0 0.0
  %72 = vmatpush1.msra.mxu0 0.0
  %73 = vmatprep.subr.mxu0 0.0
  %74 = vmatpush1.msra.mxu0 0.0
  %75 = vmatprep.subr.mxu0 0.0
  %76 = vmatpush1.msra.mxu0 0.0
  %77 = vmatprep.subr.mxu0 0.0
  %78 = vmatpush1.msra.mxu0 0.0
  %79 = vmatprep.subr.mxu0 0.0
  %80 = vmatpush1.msra.mxu0 0.0
  %81 = vmatprep.subr.mxu0 0.0
  %82 = vmatpush1.msra.mxu0 0.0
  %83 = vmatprep.subr.mxu0 0.0
  %84 = vmatpush1.msra.mxu0 0.0
  %85 = vmatprep.subr.mxu0 0.0
  %86 = vmatpush1.msra.mxu0 0.0
  %87 = vmatprep.subr.mxu0 0.0
  %88 = vmatpush1.msra.mxu0 0.0
  %89 = vmatprep.subr.mxu0 0.0
  %90 = vmatpush1.msra.mxu0 0.0
  %91 = vmatprep.subr.mxu0 0.0
  %92 = vmatpush1.msra.mxu0 0.0
  %93 = vmatprep.subr.mxu0 0.0
  %94 = vmatpush1.msra.mxu0 0.0
  %95 = vmatprep.subr.mxu0 0.0
  %96 = vmatpush1.msra.mxu0 0.0
  %97 = vmatprep.subr.mxu0 0.0
  %98 = vmatpush1.msra.mxu0 0.0
  %99 = vmatprep.mubr.f32.mxu0 0.0
  %100 = vmatmul.mubr.f32.gmra.mrb[0].mxu0 %v29
  %v101 = vpop.f32.mrb[0].mxu0
  %v102 = vadd.f32 0.0, %v101
  %v103 = vpop.f32.mrb[0].mxu0
  %104 = vdwg.mxu0
  %v106 = vsel %vm27, %v15, 0
  %v108 = vsel %vm31, %v14, 0
  %110 = vmatprep.subr.mxu0 0.0
  %111 = vmatpush1.msra.mxu0 %v108
  %112 = vmatprep.subr.mxu0 0.0
  %113 = vmatpush1.msra.mxu0 0.0
  %114 = vmatprep.subr.mxu0 0.0
  %115 = vmatpush1.msra.mxu0 0.0
  %116 = vmatprep.subr.mxu0 0.0
  %117 = vmatpush1.msra.mxu0 0.0
  %118 = vmatprep.subr.mxu0 0.0
  %119 = vmatpush1.msra.mxu0 0.0
  %120 = vmatprep.subr.mxu0 0.0
  %121 = vmatpush1.msra.mxu0 0.0
  %122 = vmatprep.subr.mxu0 0.0
  %123 = vmatpush1.msra.mxu0 0.0
  %124 = vmatprep.subr.mxu0 0.0
  %125 = vmatpush1.msra.mxu0 0.0
  %126 = vmatprep.subr.mxu0 0.0
  %127 = vmatpush1.msra.mxu0 0.0
  %128 = vmatprep.subr.mxu0 0.0
  %129 = vmatpush1.msra.mxu0 0.0
  %130 = vmatprep.subr.mxu0 0.0
  %131 = vmatpush1.msra.mxu0 0.0
  %132 = vmatprep.subr.mxu0 0.0
  %133 = vmatpush1.msra.mxu0 0.0
  %134 = vmatprep.subr.mxu0 0.0
  %135 = vmatpush1.msra.mxu0 0.0
  %136 = vmatprep.subr.mxu0 0.0
  %137 = vmatpush1.msra.mxu0 0.0
  %138 = vmatprep.subr.mxu0 0.0
  %139 = vmatpush1.msra.mxu0 0.0
  %140 = vmatprep.subr.mxu0 0.0
  %141 = vmatpush1.msra.mxu0 0.0
  %142 = vmatprep.subr.mxu0 0.0
  %143 = vmatpush1.msra.mxu0 0.0
  %144 = vmatprep.subr.mxu0 0.0
  %145 = vmatpush1.msra.mxu0 0.0
  %146 = vmatprep.subr.mxu0 0.0
  %147 = vmatpush1.msra.mxu0 0.0
  %148 = vmatprep.subr.mxu0 0.0
  %149 = vmatpush1.msra.mxu0 0.0
  %150 = vmatprep.subr.mxu0 0.0
  %151 = vmatpush1.msra.mxu0 0.0
  %152 = vmatprep.subr.mxu0 0.0
  %153 = vmatpush1.msra.mxu0 0.0
  %154 = vmatprep.subr.mxu0 0.0
  %155 = vmatpush1.msra.mxu0 0.0
  %156 = vmatprep.subr.mxu0 0.0
  %157 = vmatpush1.msra.mxu0 0.0
  %158 = vmatprep.subr.mxu0 0.0
  %159 = vmatpush1.msra.mxu0 0.0
  %160 = vmatprep.subr.mxu0 0.0
  %161 = vmatpush1.msra.mxu0 0.0
  %162 = vmatprep.subr.mxu0 0.0
  %163 = vmatpush1.msra.mxu0 0.0
  %164 = vmatprep.subr.mxu0 0.0
  %165 = vmatpush1.msra.mxu0 0.0
  %166 = vmatprep.subr.mxu0 0.0
  %167 = vmatpush1.msra.mxu0 0.0
  %168 = vmatprep.subr.mxu0 0.0
  %169 = vmatpush1.msra.mxu0 0.0
  %170 = vmatprep.subr.mxu0 0.0
  %171 = vmatpush1.msra.mxu0 0.0
  %172 = vmatprep.subr.mxu0 0.0
  %173 = vmatpush1.msra.mxu0 0.0
  %174 = vmatprep.mubr.f32.mxu0 0.0
  %175 = vmatmul.mubr.f32.gmra.mrb[0].mxu0 %v106
  %v176 = vpop.f32.mrb[0].mxu0
  %v177 = vadd.f32 %v102, %v176
  %v178 = vpop.f32.mrb[0].mxu0
  %179 = vdwg.mxu0
  %s180 = scalar_lea.vmem %s1, 16
  %v181 = vld [vmem:[%s180] sm:$0xff]
  %182 = vrot.lane.b32.xlu0 %v14, 126
  %v183 = vpop.permute.xlu0 %182
  %185 = vrot.lane.b32.xlu0 %v14, 34
  %v186 = vpop.permute.xlu0 %185
  %vm188 = vcmask 277504
  %v189 = vsel %vm188, %v183, %v186
  %v191 = vsel %vm27, %v181, 0
  %v194 = vsel %vm31, %v189, 0
  %196 = vmatprep.subr.mxu0 0.0
  %197 = vmatpush1.msra.mxu0 %v194
  %198 = vmatprep.subr.mxu0 0.0
  %199 = vmatpush1.msra.mxu0 0.0
  %200 = vmatprep.subr.mxu0 0.0
  %201 = vmatpush1.msra.mxu0 0.0
  %202 = vmatprep.subr.mxu0 0.0
  %203 = vmatpush1.msra.mxu0 0.0
  %204 = vmatprep.subr.mxu0 0.0
  %205 = vmatpush1.msra.mxu0 0.0
  %206 = vmatprep.subr.mxu0 0.0
  %207 = vmatpush1.msra.mxu0 0.0
  %208 = vmatprep.subr.mxu0 0.0
  %209 = vmatpush1.msra.mxu0 0.0
  %210 = vmatprep.subr.mxu0 0.0
  %211 = vmatpush1.msra.mxu0 0.0
  %212 = vmatprep.subr.mxu0 0.0
  %213 = vmatpush1.msra.mxu0 0.0
  %214 = vmatprep.subr.mxu0 0.0
  %215 = vmatpush1.msra.mxu0 0.0
  %216 = vmatprep.subr.mxu0 0.0
  %217 = vmatpush1.msra.mxu0 0.0
  %218 = vmatprep.subr.mxu0 0.0
  %219 = vmatpush1.msra.mxu0 0.0
  %220 = vmatprep.subr.mxu0 0.0
  %221 = vmatpush1.msra.mxu0 0.0
  %222 = vmatprep.subr.mxu0 0.0
  %223 = vmatpush1.msra.mxu0 0.0
  %224 = vmatprep.subr.mxu0 0.0
  %225 = vmatpush1.msra.mxu0 0.0
  %226 = vmatprep.subr.mxu0 0.0
  %227 = vmatpush1.msra.mxu0 0.0
  %228 = vmatprep.subr.mxu0 0.0
  %229 = vmatpush1.msra.mxu0 0.0
  %230 = vmatprep.subr.mxu0 0.0
  %231 = vmatpush1.msra.mxu0 0.0
  %232 = vmatprep.subr.mxu0 0.0
  %233 = vmatpush1.msra.mxu0 0.0
  %234 = vmatprep.subr.mxu0 0.0
  %235 = vmatpush1.msra.mxu0 0.0
  %236 = vmatprep.subr.mxu0 0.0
  %237 = vmatpush1.msra.mxu0 0.0
  %238 = vmatprep.subr.mxu0 0.0
  %239 = vmatpush1.msra.mxu0 0.0
  %240 = vmatprep.subr.mxu0 0.0
  %241 = vmatpush1.msra.mxu0 0.0
  %242 = vmatprep.subr.mxu0 0.0
  %243 = vmatpush1.msra.mxu0 0.0
  %244 = vmatprep.subr.mxu0 0.0
  %245 = vmatpush1.msra.mxu0 0.0
  %246 = vmatprep.subr.mxu0 0.0
  %247 = vmatpush1.msra.mxu0 0.0
  %248 = vmatprep.subr.mxu0 0.0
  %249 = vmatpush1.msra.mxu0 0.0
  %250 = vmatprep.subr.mxu0 0.0
  %251 = vmatpush1.msra.mxu0 0.0
  %252 = vmatprep.subr.mxu0 0.0
  %253 = vmatpush1.msra.mxu0 0.0
  %254 = vmatprep.subr.mxu0 0.0
  %255 = vmatpush1.msra.mxu0 0.0
  %256 = vmatprep.subr.mxu0 0.0
  %257 = vmatpush1.msra.mxu0 0.0
  %258 = vmatprep.subr.mxu0 0.0
  %259 = vmatpush1.msra.mxu0 0.0
  %260 = vmatprep.mubr.f32.mxu0 0.0
  %261 = vmatmul.mubr.f32.gmra.mrb[0].mxu0 %v191
  %v262 = vpop.f32.mrb[0].mxu0
  %v263 = vadd.f32 0.0, %v262
  %v264 = vpop.f32.mrb[0].mxu0
  %265 = vdwg.mxu0
  %v266 = vadd.f32 %v177, %v263
  %v267 = vld [vmem:[%s2] sm:$0xff]
  %269 = vset.pattern.permute.xlu0 0
  %270 = vperm.xlu0 %269, %v267
  %v271 = vpop.permute.xlu0 %270
  %v273 = vadd.f32 %v266, %v271
  %v274 = vmul.f32 %v273, 0.1
  %v275 = vmax.f32 %v273, %v274
  %v276 = vmin.f32 %v275, 20.0
  %vm277 = vcmask 293888
  %278 = vst.msk [vmem:[%s3] sm:$0xff] %vm277, %v276
  // Predicated region
  $region14: #{conv1d_activation.1} parent=0 // pred_check
    _
  $region15: #{conv1d_activation.1} parent=0 // pred_check_branch
    %280 = sbr.rel (0) target = $region17
  $region16: #{conv1d_activation.1} parent=0 // pred_region
    _
  $region17: #{conv1d_activation.1} parent=0 // pred_fallthru
    _
  // Predicated region
  $region18: #{conv1d_activation.1} parent=0 // pred_check
    _
  $region19: #{conv1d_activation.1} parent=0 // pred_check_branch
    %282 = sbr.rel (0) target = $region21
  $region20: #{conv1d_activation.1} parent=0 // pred_region
    _
  $region21: #{conv1d_activation.1} parent=0 // pred_fallthru
    _

</llo_original>
